<compile_context>
chip_gen: v6e
topology: v6e:2x2x1
jax: 0.10.0
libtpu: 0.0.40
codegen_flags: <defaults>
</compile_context>

<pallas_src>
import functools

import jax
import jax.numpy as jnp
import numpy as np
from jax.experimental import pallas as pl
from jax.experimental.pallas import tpu as pltpu

_LANE = 128


# ------------------------------ sizing helpers ------------------------------
def _vmem_budgets(block_budget_bytes=None):
    """(byte budget for double-buffered stream blocks, vmem_limit_bytes)."""
    try:
        cap = int(pltpu.get_tpu_info().vmem_capacity_bytes)
    except Exception:
        cap = 64 << 20                      # conservative: v7x per-core VMEM
    vmem_limit = min((cap * 3) // 4, 96 << 20)
    if block_budget_bytes is None:
        budget = min(cap // 2, 48 << 20)
    else:
        budget = int(block_budget_bytes)
    budget = max(min(budget, vmem_limit - (8 << 20)), 4 << 20)
    return budget, vmem_limit


def _pick_tiles(C, HW, stream_bytes_per_elem, budget_bytes):
    """Return (t_hw, chunk_width, n_chunks) for the flattened spatial axis.

    stream_bytes_per_elem = sum of bytes/element over all blocks that scale
    with t_hw, already including the x2 for double-buffering.
    """
    if HW < _LANE:
        return HW, HW, 1                    # whole (narrow) spatial extent
    cap = (budget_bytes // max(C * stream_bytes_per_elem, 1)) // _LANE * _LANE
    cap = max(cap, _LANE)
    t_hw = max(_LANE, min(cap, (HW // _LANE) * _LANE))
    return t_hw, _LANE, t_hw // _LANE


def _as_cvec(p, C):
    return jnp.asarray(p, jnp.float32).reshape(C, 1)


# ------------------------------- stats kernel -------------------------------
def _stats_kernel(x_ref, rmean_ref, sum_ref, sq_ref, *,
                  hw_total, t_hw, cw, n_chunks, has_tail, unroll):
    j = pl.program_id(1)                    # spatial tile (reduction axis)
    nj = pl.num_programs(1)
    C = x_ref.shape[0]

    @pl.when(j == 0)
    def _init():                            # output block is grid-resident over j
        sum_ref[...] = jnp.zeros_like(sum_ref)
        sq_ref[...] = jnp.zeros_like(sq_ref)

    # Hoisted once per grid step: lane-replicated running-mean shift.
    rm = jnp.broadcast_to(rmean_ref[...], (C, cw))
    zeros = jnp.zeros((C, cw), jnp.float32)

    def unmasked_chunk(k, carry):
        ps, psq = carry
        off = pl.multiple_of(k * cw, cw)
        u = x_ref[:, pl.ds(off, cw)].astype(jnp.float32) - rm
        return ps + u, psq + u * u

    def masked_chunk(k, carry):             # only used on the last spatial tile
        ps, psq = carry
        off = pl.multiple_of(k * cw, cw)
        xc = x_ref[:, pl.ds(off, cw)].astype(jnp.float32)
        col = jax.lax.broadcasted_iota(jnp.int32, (C, cw), 1) + (off + j * t_hw)
        u = jnp.where(col < hw_total, xc - rm, 0.0)
        return ps + u, psq + u * u

    def commit(ps, psq):                    # single commit per grid step
        sum_ref[...] += jnp.sum(ps, axis=1, keepdims=True)
        sq_ref[...] += jnp.sum(psq, axis=1, keepdims=True)

    if has_tail:
        @pl.when(j < nj - 1)
        def _fast():
            ps, psq = jax.lax.fori_loop(0, n_chunks, unmasked_chunk,
                                        (zeros, zeros), unroll=unroll)
            commit(ps, psq)

        @pl.when(j == nj - 1)
        def _tail():
            ps, psq = jax.lax.fori_loop(0, n_chunks, masked_chunk,
                                        (zeros, zeros), unroll=unroll)
            commit(ps, psq)
    else:
        ps, psq = jax.lax.fori_loop(0, n_chunks, unmasked_chunk,
                                    (zeros, zeros), unroll=unroll)
        commit(ps, psq)


def _stats_forward(x3, rmean, budget_bytes, vmem_limit):
    N, C, HW = x3.shape
    xb = jnp.dtype(x3.dtype).itemsize
    t_hw, cw, n_chunks = _pick_tiles(C, HW, 2 * xb, budget_bytes)
    J = pl.cdiv(HW, t_hw)
    has_tail = (HW % t_hw) != 0

    kernel = functools.partial(
        _stats_kernel, hw_total=HW, t_hw=t_hw, cw=cw, n_chunks=n_chunks,
        has_tail=has_tail, unroll=min(8, n_chunks))

    psum, psq = pl.pallas_call(
        kernel,
        out_shape=(jax.ShapeDtypeStruct((N, C, 1), jnp.float32),
                   jax.ShapeDtypeStruct((N, C, 1), jnp.float32)),
        grid_spec=pltpu.PrefetchScalarGridSpec(
            num_scalar_prefetch=0,
            grid=(N, J),
            in_specs=[pl.BlockSpec((None, C, t_hw), lambda n, j: (n, 0, j)),
                      pl.BlockSpec((C, 1), lambda n, j: (0, 0))],
            out_specs=(pl.BlockSpec((None, C, 1), lambda n, j: (n, 0, 0)),
                       pl.BlockSpec((None, C, 1), lambda n, j: (n, 0, 0)))),
        compiler_params=pltpu.CompilerParams(
            dimension_semantics=("parallel", "arbitrary"),
            vmem_limit_bytes=vmem_limit),
    )(x3, rmean)
    return psum, psq


# ----------------------------- normalize kernel -----------------------------
def _affine_kernel(x_ref, scale_ref, shift_ref, y_ref, *, cw, n_chunks, unroll):
    C = x_ref.shape[0]
    # Hoisted lane-replicated per-channel scale/shift (whole-vreg FMA operands).
    sc = jnp.broadcast_to(scale_ref[...], (C, cw))
    sh = jnp.broadcast_to(shift_ref[...], (C, cw))

    def body(k, carry):
        off = pl.multiple_of(k * cw, cw)
        xc = x_ref[:, pl.ds(off, cw)].astype(jnp.float32)   # per-chunk upcast
        y_ref[:, pl.ds(off, cw)] = (xc * sc + sh).astype(y_ref.dtype)
        return carry

    jax.lax.fori_loop(0, n_chunks, body, 0, unroll=unroll)


def _affine_forward(x3, scale, shift, out_dtype, budget_bytes, vmem_limit):
    N, C, HW = x3.shape
    xb = jnp.dtype(x3.dtype).itemsize
    yb = jnp.dtype(out_dtype).itemsize
    t_hw, cw, n_chunks = _pick_tiles(C, HW, 2 * (xb + yb), budget_bytes)
    J = pl.cdiv(HW, t_hw)

    kernel = functools.partial(_affine_kernel, cw=cw, n_chunks=n_chunks,
                               unroll=min(8, n_chunks))
    y = pl.pallas_call(
        kernel,
        out_shape=jax.ShapeDtypeStruct((N, C, HW), out_dtype),
        grid_spec=pltpu.PrefetchScalarGridSpec(
            num_scalar_prefetch=0,
            grid=(N, J),
            in_specs=[pl.BlockSpec((None, C, t_hw), lambda n, j: (n, 0, j)),
                      pl.BlockSpec((C, 1), lambda n, j: (0, 0)),
                      pl.BlockSpec((C, 1), lambda n, j: (0, 0))],
            out_specs=pl.BlockSpec((None, C, t_hw), lambda n, j: (n, 0, j))),
        compiler_params=pltpu.CompilerParams(
            dimension_semantics=("parallel", "parallel"),
            vmem_limit_bytes=vmem_limit),
    )(x3, scale, shift)
    return y


# -------------------------------- wrappers ----------------------------------
def batch_renorm2d_train(x_nchw, running_mean, running_var, weight=None, bias=None,
                         *, eps=1e-3, momentum=0.01, r_max=1.0, d_max=0.0,
                         out_dtype=jnp.float32, block_budget_bytes=None):
    """Training-mode forward. Returns (y, new_running_mean, new_running_var)."""
    N, C, H, W = x_nchw.shape
    HW = H * W
    M = N * HW
    x3 = x_nchw.reshape(N, C, HW)           # contiguous-dim merge: metadata only

    rmean = _as_cvec(running_mean, C)
    rvar = _as_cvec(running_var, C)
    w = _as_cvec(weight, C) if weight is not None else jnp.ones((C, 1), jnp.float32)
    b = _as_cvec(bias, C) if bias is not None else jnp.zeros((C, 1), jnp.float32)

    budget, vmem_limit = _vmem_budgets(block_budget_bytes)

    # Pass 1: per-batch shifted sums (register-resident partials in-kernel).
    psum, psq = _stats_forward(x3, rmean, budget, vmem_limit)
    s = jnp.sum(psum, axis=0)                # (C, 1), shifted by running_mean
    sq = jnp.sum(psq, axis=0)                # (C, 1)

    # Tiny per-channel glue in plain JAX (C elements — negligible).
    mean = rmean + s * (1.0 / M)
    var = (sq - s * s * (1.0 / M)) * (1.0 / max(M - 1, 1))   # unbiased (torch .var())
    var = jnp.maximum(var, 0.0)
    std = jnp.sqrt(var + eps)
    rstd = jnp.sqrt(rvar + eps)
    r = jnp.clip(std / rstd, 1.0 / r_max, r_max)
    d = jnp.clip((mean - rmean) / rstd, -d_max, d_max)
    # y = w*((x-mean)/std*r + d) + b  ==  x*scale + shift
    scale = w * r / std
    shift = b + w * d - mean * scale
    # running.lerp_(batch, momentum) == running + momentum*(batch - running)
    new_rmean = rmean + momentum * (mean - rmean)
    new_rvar = rvar + momentum * (var - rvar)

    # Pass 2: y = x*scale + shift (both grid axes parallel -> both TCs stream).
    y = _affine_forward(x3, scale, shift, out_dtype, budget, vmem_limit)

    return (y.reshape(N, C, H, W),
            new_rmean.reshape(1, C, 1, 1),
            new_rvar.reshape(1, C, 1, 1))


def batch_renorm2d_eval(x_nchw, running_mean, running_var, weight=None, bias=None,
                        *, eps=1e-3, out_dtype=jnp.float32, block_budget_bytes=None):
    """Eval-mode forward: (x - running_mean)/sqrt(running_var + eps), then affine."""
    N, C, H, W = x_nchw.shape
    HW = H * W
    x3 = x_nchw.reshape(N, C, HW)

    rmean = _as_cvec(running_mean, C)
    rvar = _as_cvec(running_var, C)
    w = _as_cvec(weight, C) if weight is not None else jnp.ones((C, 1), jnp.float32)
    b = _as_cvec(bias, C) if bias is not None else jnp.zeros((C, 1), jnp.float32)

    inv_std = 1.0 / jnp.sqrt(rvar + eps)
    scale = w * inv_std
    shift = b - rmean * scale

    budget, vmem_limit = _vmem_budgets(block_budget_bytes)
    y = _affine_forward(x3, scale, shift, out_dtype, budget, vmem_limit)
    return y.reshape(N, C, H, W)


# -------------------- pure-JAX reference (for verification) -----------------
def _ref_train(x, rmean, rvar, w, b, eps, momentum, r_max, d_max):
    mean = x.mean(axis=(0, 2, 3), keepdims=True)
    var = x.var(axis=(0, 2, 3), keepdims=True, ddof=1)
    std = jnp.sqrt(var + eps)
    rstd = jnp.sqrt(rvar + eps)
    r = jnp.clip(std / rstd, 1.0 / r_max, r_max)
    d = jnp.clip((mean - rmean) / rstd, -d_max, d_max)
    y = w * ((x - mean) / std * r + d) + b
    new_rmean = rmean + momentum * (mean - rmean)
    new_rvar = rvar + momentum * (var - rvar)
    return y, new_rmean, new_rvar


def _ref_eval(x, rmean, rvar, w, b, eps):
    return w * ((x - rmean) / jnp.sqrt(rvar + eps)) + b


if __name__ == "__main__":
    eps, momentum, r_max, d_max = 1e-3, 0.01, 3.0, 5.0
    key = jax.random.PRNGKey(0)

    def make_inputs(k, N, C, H, W):
        kx, kw, kb, km, kv = jax.random.split(k, 5)
        x = jax.random.normal(kx, (N, C, H, W), jnp.float32) * 2.0 + 0.5
        weight = 1.0 + 0.1 * jax.random.normal(kw, (1, C, 1, 1), jnp.float32)
        bias = 0.1 * jax.random.normal(kb, (1, C, 1, 1), jnp.float32)
        rmean = 0.05 * jax.random.normal(km, (1, C, 1, 1), jnp.float32)
        rvar = 1.0 + 0.2 * jax.random.uniform(kv, (1, C, 1, 1), jnp.float32)
        return x, weight, bias, rmean, rvar

    def check_train(k, shape):
        N, C, H, W = shape
        x, w, b, rm, rv = make_inputs(k, N, C, H, W)
        y, nrm, nrv = batch_renorm2d_train(
            x, rm, rv, w, b, eps=eps, momentum=momentum, r_max=r_max, d_max=d_max)
        jax.block_until_ready((y, nrm, nrv))
        y_r, rm_r, rv_r = _ref_train(x, rm, rv, w, b, eps, momentum, r_max, d_max)
        np.testing.assert_allclose(np.asarray(y), np.asarray(y_r), rtol=1e-5, atol=1e-5)
        np.testing.assert_allclose(np.asarray(nrm), np.asarray(rm_r), rtol=1e-5, atol=1e-6)
        np.testing.assert_allclose(np.asarray(nrv), np.asarray(rv_r), rtol=1e-5, atol=1e-6)

    k1, k2, k3, k4 = jax.random.split(key, 4)
    check_train(k1, (2, 4, 16, 16))     # HW = 256: 128-aligned tiles, no tail
    check_train(k2, (2, 6, 10, 15))     # HW = 150: partial last tile (masked tail path)
    check_train(k3, (3, 5, 5, 7))       # HW = 35 < 128: narrow full-extent tile

    # Eval-mode forward
    x, w, b, rm, rv = make_inputs(k4, 2, 4, 16, 16)
    y_e = batch_renorm2d_eval(x, rm, rv, w, b, eps=eps)
    jax.block_until_ready(y_e)
    np.testing.assert_allclose(np.asarray(y_e),
                               np.asarray(_ref_eval(x, rm, rv, w, b, eps)),
                               rtol=1e-5, atol=1e-5)

    print("KERNEL_OK")
</pallas_src>

<mosaic_0001>
module attributes {stable_mosaic.version = 11 : i64} {
  func.func @_stats_kernel(%arg0: i32, %arg1: i32, %arg2: memref<1x4x256xf32, #tpu.memory_space<vmem>>, %arg3: memref<4x1xf32, #tpu.memory_space<vmem>>, %arg4: memref<1x4x1xf32, #tpu.memory_space<vmem>>, %arg5: memref<1x4x1xf32, #tpu.memory_space<vmem>>) attributes {dimension_semantics = [#tpu.dimension_semantics<parallel>, #tpu.dimension_semantics<arbitrary>], iteration_bounds = array<i64: 2, 1>, scalar_prefetch = 0 : i64, scratch_operands = 0 : i64, tpu.core_type = #tpu.core_type<tc>, window_params = [{transform_indices = @transform_0, window_bounds = array<i64: 1, 4, 256>}, {pipeline_mode = #tpu.pipeline_mode<synchronous>, transform_indices = @transform_1, window_bounds = array<i64: 4, 1>}, {transform_indices = @transform_2, window_bounds = array<i64: 1, 4, 1>}, {transform_indices = @transform_3, window_bounds = array<i64: 1, 4, 1>}]} {
    %c0_i32 = arith.constant 0 : i32
    %0 = arith.cmpi eq, %arg1, %c0_i32 : i32
    %1 = arith.extui %0 : i1 to i32
    %c0_i32_0 = arith.constant 0 : i32
    %2 = arith.cmpi ne, %1, %c0_i32_0 : i32
    scf.if %2 {
      %cst_22 = arith.constant 0.000000e+00 : f32
      %41 = vector.broadcast %cst_22 : f32 to vector<4x1xf32>
      %c0_23 = arith.constant 0 : index
      %c0_24 = arith.constant 0 : index
      %c0_25 = arith.constant 0 : index
      %42 = vector.load %arg4[%c0_23, %c0_24, %c0_25] : memref<1x4x1xf32, #tpu.memory_space<vmem>>, vector<1x4x1xf32>
      %43 = vector.shape_cast %42 : vector<1x4x1xf32> to vector<4x1xf32>
      %44 = vector.shape_cast %41 : vector<4x1xf32> to vector<1x4x1xf32>
      tpu.vector_store %arg4[%c0_23, %c0_24, %c0_25], %44 {strides = array<i32>} : memref<1x4x1xf32, #tpu.memory_space<vmem>>, vector<1x4x1xf32>,
      %cst_26 = arith.constant 0.000000e+00 : f32
      %45 = vector.broadcast %cst_26 : f32 to vector<4x1xf32>
      %c0_27 = arith.constant 0 : index
      %c0_28 = arith.constant 0 : index
      %c0_29 = arith.constant 0 : index
      %46 = vector.load %arg5[%c0_27, %c0_28, %c0_29] : memref<1x4x1xf32, #tpu.memory_space<vmem>>, vector<1x4x1xf32>
      %47 = vector.shape_cast %46 : vector<1x4x1xf32> to vector<4x1xf32>
      %48 = vector.shape_cast %45 : vector<4x1xf32> to vector<1x4x1xf32>
      tpu.vector_store %arg5[%c0_27, %c0_28, %c0_29], %48 {strides = array<i32>} : memref<1x4x1xf32, #tpu.memory_space<vmem>>, vector<1x4x1xf32>,
    } else {
    }
    %c0 = arith.constant 0 : index
    %c0_1 = arith.constant 0 : index
    %3 = vector.load %arg3[%c0, %c0_1] : memref<4x1xf32, #tpu.memory_space<vmem>>, vector<4x1xf32>
    %4 = vector.shape_cast %3 : vector<4x1xf32> to vector<4x1xf32>
    %5 = vector.broadcast %4 : vector<4x1xf32> to vector<4x128xf32>
    %cst = arith.constant 0.000000e+00 : f32
    %6 = vector.broadcast %cst : f32 to vector<4x128xf32>
    %c0_i32_2 = arith.constant 0 : i32
    %c128_i32 = arith.constant 128 : i32
    %7 = arith.muli %c0_i32_2, %c128_i32 : i32
    %8 = tpu.assume_multiple %7, 128 : i32
    %c0_3 = arith.constant 0 : index
    %c0_4 = arith.constant 0 : index
    %9 = arith.index_cast %8 : i32 to index
    %10 = vector.load %arg2[%c0_3, %c0_4, %9] : memref<1x4x256xf32, #tpu.memory_space<vmem>>, vector<1x4x128xf32>
    %11 = vector.shape_cast %10 : vector<1x4x128xf32> to vector<4x128xf32>
    %12 = arith.subf %11, %5 : vector<4x128xf32>
    %13 = arith.addf %6, %12 : vector<4x128xf32>
    %14 = arith.mulf %12, %12 : vector<4x128xf32>
    %15 = arith.addf %6, %14 : vector<4x128xf32>
    %c1_i32 = arith.constant 1 : i32
    %c128_i32_5 = arith.constant 128 : i32
    %16 = arith.muli %c1_i32, %c128_i32_5 : i32
    %17 = tpu.assume_multiple %16, 128 : i32
    %c0_6 = arith.constant 0 : index
    %c0_7 = arith.constant 0 : index
    %18 = arith.index_cast %17 : i32 to index
    %19 = vector.load %arg2[%c0_6, %c0_7, %18] : memref<1x4x256xf32, #tpu.memory_space<vmem>>, vector<1x4x128xf32>
    %20 = vector.shape_cast %19 : vector<1x4x128xf32> to vector<4x128xf32>
    %21 = arith.subf %20, %5 : vector<4x128xf32>
    %22 = arith.addf %13, %21 : vector<4x128xf32>
    %23 = arith.mulf %21, %21 : vector<4x128xf32>
    %24 = arith.addf %15, %23 : vector<4x128xf32>
    %c2_i32 = arith.constant 2 : i32
    %c0_8 = arith.constant 0 : index
    %c0_9 = arith.constant 0 : index
    %c0_10 = arith.constant 0 : index
    %25 = vector.load %arg4[%c0_8, %c0_9, %c0_10] : memref<1x4x1xf32, #tpu.memory_space<vmem>>, vector<1x4x1xf32>
    %26 = vector.shape_cast %25 : vector<1x4x1xf32> to vector<4x1xf32>
    %cst_11 = arith.constant dense<0.000000e+00> : vector<4xf32>
    %27 = vector.multi_reduction <add>, %22, %cst_11 [1] : vector<4x128xf32> to vector<4xf32>
    %28 = vector.shape_cast %27 : vector<4xf32> to vector<4x1xf32>
    %29 = arith.addf %26, %28 : vector<4x1xf32>
    %c0_12 = arith.constant 0 : index
    %c0_13 = arith.constant 0 : index
    %c0_14 = arith.constant 0 : index
    %30 = vector.load %arg4[%c0_12, %c0_13, %c0_14] : memref<1x4x1xf32, #tpu.memory_space<vmem>>, vector<1x4x1xf32>
    %31 = vector.shape_cast %30 : vector<1x4x1xf32> to vector<4x1xf32>
    %32 = vector.shape_cast %29 : vector<4x1xf32> to vector<1x4x1xf32>
    tpu.vector_store %arg4[%c0_12, %c0_13, %c0_14], %32 {strides = array<i32>} : memref<1x4x1xf32, #tpu.memory_space<vmem>>, vector<1x4x1xf32>,
    %c0_15 = arith.constant 0 : index
    %c0_16 = arith.constant 0 : index
    %c0_17 = arith.constant 0 : index
    %33 = vector.load %arg5[%c0_15, %c0_16, %c0_17] : memref<1x4x1xf32, #tpu.memory_space<vmem>>, vector<1x4x1xf32>
    %34 = vector.shape_cast %33 : vector<1x4x1xf32> to vector<4x1xf32>
    %cst_18 = arith.constant dense<0.000000e+00> : vector<4xf32>
    %35 = vector.multi_reduction <add>, %24, %cst_18 [1] : vector<4x128xf32> to vector<4xf32>
    %36 = vector.shape_cast %35 : vector<4xf32> to vector<4x1xf32>
    %37 = arith.addf %34, %36 : vector<4x1xf32>
    %c0_19 = arith.constant 0 : index
    %c0_20 = arith.constant 0 : index
    %c0_21 = arith.constant 0 : index
    %38 = vector.load %arg5[%c0_19, %c0_20, %c0_21] : memref<1x4x1xf32, #tpu.memory_space<vmem>>, vector<1x4x1xf32>
    %39 = vector.shape_cast %38 : vector<1x4x1xf32> to vector<4x1xf32>
    %40 = vector.shape_cast %37 : vector<4x1xf32> to vector<1x4x1xf32>
    tpu.vector_store %arg5[%c0_19, %c0_20, %c0_21], %40 {strides = array<i32>} : memref<1x4x1xf32, #tpu.memory_space<vmem>>, vector<1x4x1xf32>,
    return
  }
  func.func @transform_0(%arg0: i32, %arg1: i32) -> (i32, i32, i32) {
    %c0_i32 = arith.constant 0 : i32
    %c0_i32_0 = arith.constant 0 : i32
    return %arg0, %c0_i32, %arg1 : i32, i32, i32
  }
  func.func @transform_1(%arg0: i32, %arg1: i32) -> (i32, i32) {
    %c0_i32 = arith.constant 0 : i32
    %c0_i32_0 = arith.constant 0 : i32
    %c0_i32_1 = arith.constant 0 : i32
    return %c0_i32, %c0_i32_0 : i32, i32
  }
  func.func @transform_2(%arg0: i32, %arg1: i32) -> (i32, i32, i32) {
    %c0_i32 = arith.constant 0 : i32
    %c0_i32_0 = arith.constant 0 : i32
    %c0_i32_1 = arith.constant 0 : i32
    return %arg0, %c0_i32, %c0_i32_0 : i32, i32, i32
  }
  func.func @transform_3(%arg0: i32, %arg1: i32) -> (i32, i32, i32) {
    %c0_i32 = arith.constant 0 : i32
    %c0_i32_0 = arith.constant 0 : i32
    %c0_i32_1 = arith.constant 0 : i32
    return %arg0, %c0_i32, %c0_i32_0 : i32, i32, i32
  }
}

</mosaic_0001>

<llo_original>
// kernel: tpu_custom_call.1
$region0: #{tpu_custom_call.1}
  #allocation0 [shape = 'u32[]', space=smem, size = 0x4, offset = 0x4, fixed_abs, tag = 'smem constant byte address 0x4 - core index']
  #allocation1 [shape = 'u32[144,128]{1,0:T(1,128)}', space=vmem, size = 0x12000, scoped, tag = 'internal scratch']
  %s0 = inlined_call_operand.hbm [shape: f32[2,4,256], index: 0, kind: input, shape index: {}]
  %s1 = inlined_call_operand.vmem [shape: f32[4,1], index: 1, kind: input, shape index: {}]
  %s2 = inlined_call_operand.vmem [shape: f32[2,4,1], index: 2, kind: output, shape index: {0}]
  %s3 = inlined_call_operand.vmem [shape: f32[2,4,1], index: 3, kind: output, shape index: {1}]
  %4 = xla_tuple %s2, %s3
  %s5 = sld [smem:[#allocation0]]
  $region57: #{tpu_custom_call.1} parent=0
    _
  %s7 = ssub.s32 1, %s5
  %s8 = scalar_select 0, %s7, %s5
  $region1: #{tpu_custom_call.1} parent=0
    #allocation2 [shape = 'u8[8192]{0}', space=vmem, size = 0x2000, scoped, tag = 'input window, operand 0']
    #allocation3 [shape = 's32[2]{0}', space=sflag, size = 0x8, scoped, tag = 'scoped memory for tpu_custom_call.1']
    %9 = vsyncpa [#allocation3], 0
    %s10 = scalar_lea.sflag [#allocation3], 1
    %11 = vsyncpa %s10, 0
    loop: start=0, step=1, limit=4
    $region2: #{tpu_custom_call.1} parent=1 // loop_pre_header
      _
    $region3: #{tpu_custom_call.1} parent=1 // loop_header
      %s13 = sphi 0, %s17
      %p14 = scmp.ge.s32.totalorder %s13, 4
      %s20 = sphi 0, %s32
      %s21 = sphi 0, %s28
      %s22 = sphi 0, %s20
      %s23 = sphi 0, %s21
      %s24 = sphi 0, %s22
      %s25 = sphi 0, %s23
      %s37 = sphi 0, %s39
      %s40 = sphi 0, %s37
      %s41 = sphi 0, %s40
      %s57 = sphi 0, %s41
      %s61 = sphi 0, %s61
      %s63 = sphi 0, %s61
      %s64 = sphi 0, %s63
      %s78 = sphi 0, %s64
      %s84 = sphi 0, %s86
      %s87 = sphi 0, %s84
      %s88 = sphi 0, %s87
      %s104 = sphi 0, %s88
      %s110 = sphi 0, %s112
      %s113 = sphi 0, %s110
      %s114 = sphi 0, %s113
      %s130 = sphi 0, %s114
    $region4: #{tpu_custom_call.1} parent=1 // loop_header_branch
      %16 = sbr.rel (%p14) target = $region8
    $region5: #{tpu_custom_call.1} parent=1 // loop_body
      %s18 = ssub.s32 %s13, 1
      %s19 = ssub.s32 %s13, 2
      %s26 = sadd.s32 1, %s21
      %p27 = scmp.ge.s32.totalorder %s26, 1
      %s28 = scalar_select %p27, 0, %s26
      %s29 = sadd.s32 1, %s20
      %s30 = scalar_select %p27, %s29, %s20
      %p31 = scmp.ge.s32.totalorder %s30, 2
      %s32 = scalar_select %p31, 0, %s30
      %s33 = ssub.s32 %s20, %s32
      %s34 = ssub.s32 %s21, %s28
      %s35 = sor.u32 %s33, %s34
      %p36 = scmp.eq.s32.totalorder %s35, 0
      %s38 = sadd.s32 %s37, 1
      %s39 = scalar_select %p36, %s37, %s38
      %p42 = pneg %p36
      %p43 = scmp.eq.s32.totalorder %s13, 1
      %p44 = por %p42, %p43
      %p45 = scmp.ne.s32.totalorder %s37, %s40
      %p46 = scmp.eq.s32.totalorder %s13, 0
      %p47 = por %p45, %p46
      %p48 = scmp.ne.s32.totalorder %s37, %s40
      %p49 = scmp.eq.s32.totalorder %s18, 1
      %p50 = por %p48, %p49
      %p51 = scmp.ne.s32.totalorder %s40, %s41
      %p52 = scmp.eq.s32.totalorder %s18, 0
      %p53 = por %p51, %p52
      %p54 = scmp.ne.s32.totalorder %s40, %s41
      %p55 = scmp.eq.s32.totalorder %s19, 1
      %p56 = por %p54, %p55
      %p58 = scmp.ne.s32.totalorder %s41, %s57
      %p59 = scmp.eq.s32.totalorder %s19, 0
      %p60 = por %p58, %p59
      %s62 = sadd.s32 %s61, 1
      %p65 = scmp.eq.s32.totalorder %s13, 1
      %p66 = scmp.ne.s32.totalorder %s61, %s63
      %p67 = scmp.eq.s32.totalorder %s13, 0
      %p68 = por %p66, %p67
      %p69 = scmp.ne.s32.totalorder %s61, %s63
      %p70 = scmp.eq.s32.totalorder %s18, 1
      %p71 = por %p69, %p70
      %p72 = scmp.ne.s32.totalorder %s63, %s64
      %p73 = scmp.eq.s32.totalorder %s18, 0
      %p74 = por %p72, %p73
      %p75 = scmp.ne.s32.totalorder %s63, %s64
      %p76 = scmp.eq.s32.totalorder %s19, 1
      %p77 = por %p75, %p76
      %p79 = scmp.ne.s32.totalorder %s64, %s78
      %p80 = scmp.eq.s32.totalorder %s19, 0
      %p81 = por %p79, %p80
      %s82 = ssub.s32 %s20, %s32
      %p83 = scmp.eq.s32.totalorder %s82, 0
      %s85 = sadd.s32 %s84, 1
      %s86 = scalar_select %p83, %s84, %s85
      %p89 = pneg %p83
      %p90 = scmp.eq.s32.totalorder %s13, 1
      %p91 = por %p89, %p90
      %p92 = scmp.ne.s32.totalorder %s84, %s87
      %p93 = scmp.eq.s32.totalorder %s13, 0
      %p94 = por %p92, %p93
      %p95 = scmp.ne.s32.totalorder %s84, %s87
      %p96 = scmp.eq.s32.totalorder %s18, 1
      %p97 = por %p95, %p96
      %p98 = scmp.ne.s32.totalorder %s87, %s88
      %p99 = scmp.eq.s32.totalorder %s18, 0
      %p100 = por %p98, %p99
      %p101 = scmp.ne.s32.totalorder %s87, %s88
      %p102 = scmp.eq.s32.totalorder %s19, 1
      %p103 = por %p101, %p102
      %p105 = scmp.ne.s32.totalorder %s88, %s104
      %p106 = scmp.eq.s32.totalorder %s19, 0
      %p107 = por %p105, %p106
      %s108 = ssub.s32 %s20, %s32
      %p109 = scmp.eq.s32.totalorder %s108, 0
      %s111 = sadd.s32 %s110, 1
      %s112 = scalar_select %p109, %s110, %s111
      %p115 = pneg %p109
      %p116 = scmp.eq.s32.totalorder %s13, 1
      %p117 = por %p115, %p116
      %p118 = scmp.ne.s32.totalorder %s110, %s113
      %p119 = scmp.eq.s32.totalorder %s13, 0
      %p120 = por %p118, %p119
      %p121 = scmp.ne.s32.totalorder %s110, %s113
      %p122 = scmp.eq.s32.totalorder %s18, 1
      %p123 = por %p121, %p122
      %p124 = scmp.ne.s32.totalorder %s113, %s114
      %p125 = scmp.eq.s32.totalorder %s18, 0
      %p126 = por %p124, %p125
      %p127 = scmp.ne.s32.totalorder %s113, %s114
      %p128 = scmp.eq.s32.totalorder %s19, 1
      %p129 = por %p127, %p128
      %p131 = scmp.ne.s32.totalorder %s114, %s130
      %p132 = scmp.eq.s32.totalorder %s19, 0
      %p133 = por %p131, %p132
      %p134 = scmp.le.s32.totalorder 1, %s13
      %p135 = scmp.lt.s32.totalorder %s13, 3
      %p136 = pnand %p134, %p135
      %p137 = pneg %p136
      // Predicated region
      $region9: #{tpu_custom_call.1} parent=5 // pred_check
        _
      $region10: #{tpu_custom_call.1} parent=5 // pred_check_branch
        %139 = sbr.rel (%p136) target = $region12
      $region11: #{tpu_custom_call.1} parent=5 // pred_region
        %s140 = ssub.s32 %s13, 1
        // Predicated region
        $region13: #{tpu_custom_call.1} parent=11 // pred_check
          %p141 = pneg %p74
        $region14: #{tpu_custom_call.1} parent=11 // pred_check_branch
          %143 = sbr.rel (%p141) target = $region16
        $region15: #{tpu_custom_call.1} parent=11 // pred_region
          _
        $region16: #{tpu_custom_call.1} parent=11 // pred_fallthru
          _
      $region12: #{tpu_custom_call.1} parent=5 // pred_fallthru
        _
      %p144 = scmp.lt.s32.totalorder %s13, 2
      // Predicated region
      $region17: #{tpu_custom_call.1} parent=5 // pred_check
        %p145 = pneg %p144
      $region18: #{tpu_custom_call.1} parent=5 // pred_check_branch
        %147 = sbr.rel (%p145) target = $region20
      $region19: #{tpu_custom_call.1} parent=5 // pred_region
        // Predicated region
        $region21: #{tpu_custom_call.1} parent=19 // pred_check
          %p148 = pneg %p47
        $region22: #{tpu_custom_call.1} parent=19 // pred_check_branch
          %150 = sbr.rel (%p148) target = $region24
        $region23: #{tpu_custom_call.1} parent=19 // pred_region
          %s151 = sand.u32 %s37, 1
          %s152 = scalar_lea.sflag [#allocation3], %s151
          %s153 = sand.u32 %s37, 1
          %s154 = smul.addr %s153, 8
          %s155 = scalar_lea.vmem [#allocation2], %s154
          %s156 = smul.u32 2, %s21
          %s158 = ssub.s32 128, 128
          %159 = vsyncadd %s152, %s158
          %s160 = smul.addr %s20, 2
          %s161 = sadd.s32 %s156, %s160
          %s162 = smul.addr %s161, 64
          %s163 = scalar_lea.hbm %s0, %s162
          %s165 = sshll.u32 %s155, 4
          %s166 = int_to_ptr.vmem [resolvable:$true] %s165
          %168 = dma.hbm_to_vmem [thread:$0]  %s163, 128, %s166, %s152
        $region24: #{tpu_custom_call.1} parent=19 // pred_fallthru
          _
      $region20: #{tpu_custom_call.1} parent=5 // pred_fallthru
        _
      %p169 = scmp.le.s32.totalorder 1, %s13
      %p170 = scmp.lt.s32.totalorder %s13, 3
      %p171 = pnand %p169, %p170
      %p172 = pneg %p171
      // Predicated region
      $region25: #{tpu_custom_call.1} parent=5 // pred_check
        _
      $region26: #{tpu_custom_call.1} parent=5 // pred_check_branch
        %174 = sbr.rel (%p171) target = $region28
      $region27: #{tpu_custom_call.1} parent=5 // pred_region
        %s175 = ssub.s32 %s13, 1
        %s176 = sand.u32 %s40, 1
        %s177 = scalar_lea.sflag [#allocation3], %s176
        %s178 = sand.u32 %s40, 1
        %s179 = smul.addr %s178, 8
        %s180 = scalar_lea.vmem [#allocation2], %s179
        // Predicated region
        $region29: #{tpu_custom_call.1} parent=27 // pred_check
          %p181 = pneg %p53
        $region30: #{tpu_custom_call.1} parent=27 // pred_check_branch
          %183 = sbr.rel (%p181) target = $region32
        $region31: #{tpu_custom_call.1} parent=27 // pred_region
          %184 = dma.done %s177, 128
        $region32: #{tpu_custom_call.1} parent=27 // pred_fallthru
          _
        %s185 = sand.u32 %s40, 1
        %s186 = scalar_lea.sflag [#allocation3], %s185
        %s187 = sand.u32 %s40, 1
        %s188 = smul.addr %s187, 8
        %s189 = scalar_lea.vmem [#allocation2], %s188
        %p190 = pneg %p53
        %p191 = pneg %p50
        %p192 = pneg %p74
        %p193 = pneg %p71
        %p194 = pneg %p100
        %p195 = pneg %p97
        %p196 = scmp.lt.s32.totalorder %s22, 1
        %s197 = scalar_select %p196, %s22, 1
        %s198 = smul.addr %s197, 4
        %s199 = scalar_lea.vmem %s2, %s198
        %p200 = pneg %p126
        %p201 = pneg %p123
        %p202 = scmp.lt.s32.totalorder %s22, 1
        %s203 = scalar_select %p202, %s22, 1
        %s204 = smul.addr %s203, 4
        %s205 = scalar_lea.vmem %s3, %s204
        %s206 = smul.u32 2, %s23
        %p207 = scmp.lt.s32.totalorder %s22, 1
        %s208 = scalar_select %p207, %s22, 1
        %s209 = smul.addr %s208, 4
        %s210 = scalar_lea.vmem %s2, %s209
        %p211 = scmp.lt.s32.totalorder %s22, 1
        %s212 = scalar_select %p211, %s22, 1
        %s213 = smul.addr %s212, 4
        %s214 = scalar_lea.vmem %s3, %s213
        %p215 = scmp.eq.s32.totalorder %s23, 0
        // Predicated region
        $region33: #{tpu_custom_call.1} parent=27 // pred_check
          %p216 = pneg %p215
        $region34: #{tpu_custom_call.1} parent=27 // pred_check_branch
          %218 = sbr.rel (%p216) target = $region36
        $region35: #{tpu_custom_call.1} parent=27 // pred_region
          %vm219 = vcmask 3072
          %220 = vst.msk [vmem:[%s210] sm:$0xf] %vm219, 0.0
          %221 = vst.msk [vmem:[%s214] sm:$0xf] %vm219, 0.0
        $region36: #{tpu_custom_call.1} parent=27 // pred_fallthru
          _
        %v222 = vld [vmem:[%s1] sm:$0xf]
        %224 = vset.pattern.permute.xlu0 0
        %225 = vperm.xlu0 %224, %v222
        %v226 = vpop.permute.xlu0 %225
        %v228 = vld [vmem:[%s180] sm:$0xf]
        %v229 = vsub.f32 %v228, %v226
        %v230 = vadd.f32 %v229, 0.0
        %v231 = vmul.f32 %v229, %v229
        %v232 = vadd.f32 %v231, 0.0
        %s233 = scalar_lea.vmem %s180, 4 [#allocation2]
        %v234 = vld [vmem:[%s233] sm:$0xf]
        %v235 = vsub.f32 %v234, %v226
        %v236 = vadd.f32 %v230, %v235
        %v237 = vmul.f32 %v235, %v235
        %v238 = vadd.f32 %v232, %v237
        %v239 = vld [vmem:[%s210] sm:$0xf]
        %vm240 = vcmask 1043456
        %v241 = vsel %vm240, %v236, 0.0
        %242 = vadd.xlane.f32.xlu0 %v241
        %v243 = vpop.xlane.xlu0 %242
        %v244 = vadd.f32 %v239, %v243
        %vm245 = vcmask 3072
        %246 = vst.msk [vmem:[%s210] sm:$0xf] %vm245, %v244
        %v247 = vld [vmem:[%s214] sm:$0xf]
        %v248 = vsel %vm240, %v238, 0.0
        %249 = vadd.xlane.f32.xlu0 %v248
        %v250 = vpop.xlane.xlu0 %249
        %v251 = vadd.f32 %v247, %v250
        %252 = vst.msk [vmem:[%s214] sm:$0xf] %vm245, %v251
        %p253 = scmp.lt.s32.totalorder %s22, 1
        %s254 = scalar_select %p253, %s22, 1
        %s255 = smul.addr %s254, 4
        %s256 = scalar_lea.vmem %s2, %s255
        %p257 = scmp.lt.s32.totalorder %s22, 1
        %s258 = scalar_select %p257, %s22, 1
        %s259 = smul.addr %s258, 4
        %s260 = scalar_lea.vmem %s3, %s259
        // Predicated region
        $region37: #{tpu_custom_call.1} parent=27 // pred_check
          %p261 = pneg %p97
        $region38: #{tpu_custom_call.1} parent=27 // pred_check_branch
          %263 = sbr.rel (%p261) target = $region40
        $region39: #{tpu_custom_call.1} parent=27 // pred_region
          _
        $region40: #{tpu_custom_call.1} parent=27 // pred_fallthru
          _
        // Predicated region
        $region41: #{tpu_custom_call.1} parent=27 // pred_check
          %p264 = pneg %p123
        $region42: #{tpu_custom_call.1} parent=27 // pred_check_branch
          %266 = sbr.rel (%p264) target = $region44
        $region43: #{tpu_custom_call.1} parent=27 // pred_region
          _
        $region44: #{tpu_custom_call.1} parent=27 // pred_fallthru
          _
      $region28: #{tpu_custom_call.1} parent=5 // pred_fallthru
        _
      %p267 = scmp.le.s32.totalorder 2, %s13
      // Predicated region
      $region45: #{tpu_custom_call.1} parent=5 // pred_check
        %p268 = pneg %p267
      $region46: #{tpu_custom_call.1} parent=5 // pred_check_branch
        %270 = sbr.rel (%p268) target = $region48
      $region47: #{tpu_custom_call.1} parent=5 // pred_region
        %s271 = ssub.s32 %s13, 2
        // Predicated region
        $region49: #{tpu_custom_call.1} parent=47 // pred_check
          %p272 = pneg %p103
        $region50: #{tpu_custom_call.1} parent=47 // pred_check_branch
          %274 = sbr.rel (%p272) target = $region52
        $region51: #{tpu_custom_call.1} parent=47 // pred_region
          %p275 = scmp.lt.s32.totalorder %s24, 1
          %s276 = scalar_select %p275, %s24, 1
          %s277 = smul.addr %s276, 4
          %s278 = scalar_lea.vmem %s2, %s277
        $region52: #{tpu_custom_call.1} parent=47 // pred_fallthru
          _
        // Predicated region
        $region53: #{tpu_custom_call.1} parent=47 // pred_check
          %p279 = pneg %p129
        $region54: #{tpu_custom_call.1} parent=47 // pred_check_branch
          %281 = sbr.rel (%p279) target = $region56
        $region55: #{tpu_custom_call.1} parent=47 // pred_region
          %p282 = scmp.lt.s32.totalorder %s24, 1
          %s283 = scalar_select %p282, %s24, 1
          %s284 = smul.addr %s283, 4
          %s285 = scalar_lea.vmem %s3, %s284
        $region56: #{tpu_custom_call.1} parent=47 // pred_fallthru
          _
      $region48: #{tpu_custom_call.1} parent=5 // pred_fallthru
        _
    $region6: #{tpu_custom_call.1} parent=1 // loop_footer
      %s17 = sadd.s32 1, %s13
    $region7: #{tpu_custom_call.1} parent=1 // loop_footer_branch
      %12 = sbr.rel target = $region3
    $region8: #{tpu_custom_call.1} parent=1 // loop_exit
      _
    %286 = vsyncpa [#allocation3], 1
    %s287 = scalar_lea.sflag [#allocation3], 1
    %288 = vsyncpa %s287, 1

</llo_original>
